<compile_context>
chip_gen: v6e
topology: v6e:2x2x1
jax: 0.10.0
libtpu: 0.0.40
codegen_flags: <defaults>
</compile_context>

<pallas_src>
import jax
import jax.numpy as jnp
from jax.experimental import pallas as pl
from jax.experimental.pallas import tpu as pltpu


def _round_up(a, b):
    return ((a + b - 1) // b) * b


def _cdiv(a, b):
    return -(-a // b)


def _make_attention_kernel(k_is_one, compute_dtype):
    if k_is_one:
        def kernel(h_ref, w1_ref, b1_ref, w2_ref, b2_ref, a_ref):
            # h_ref:(tm,L) f32  w1_ref:(L,D) f32  b1_ref:(1,D) f32
            # w2_ref:(1,D) f32 row  b2_ref:(1,1) f32  a_ref:(tm,1) out
            h = h_ref[...].astype(compute_dtype)     # in-kernel cast (VPU, free)
            w1 = w1_ref[...].astype(compute_dtype)
            z = jnp.dot(h, w1, preferred_element_type=jnp.float32)
            z = jnp.tanh(z + b1_ref[...])
            # K == 1: VPU multiply + lane reduce instead of a degenerate
            # (tm,D)@(D,1) MXU matvec.  Output stays (tm, 1) -- no lane padding.
            a = jnp.sum(z * w2_ref[...], axis=-1, keepdims=True) + b2_ref[...]
            a_ref[...] = a.astype(a_ref.dtype)
    else:
        def kernel(h_ref, w1_ref, b1_ref, w2_ref, b2_ref, a_ref):
            # w2_ref:(D,Kout) f32  b2_ref:(1,Kout) f32  a_ref:(tm,Kout) out
            h = h_ref[...].astype(compute_dtype)
            w1 = w1_ref[...].astype(compute_dtype)
            z = jnp.dot(h, w1, preferred_element_type=jnp.float32)
            z = jnp.tanh(z + b1_ref[...])
            a = jnp.dot(z, w2_ref[...],
                        preferred_element_type=jnp.float32) + b2_ref[...]
            a_ref[...] = a.astype(a_ref.dtype)
    return kernel


def _pick_vmem_budget():
    """~Half of physical VMEM: ~64 MiB on v5e/v6e (128 MiB), ~32 MiB on v7x."""
    try:
        info = pltpu.get_tpu_info()
        cap = int(getattr(info, "vmem_capacity_bytes", 64 * 1024 * 1024))
    except Exception:
        cap = 64 * 1024 * 1024
    return max(16 * 1024 * 1024, min(cap // 2, 96 * 1024 * 1024))


def attention_forward(x, w1, b1, w2, b2, *, tm=None,
                      compute_dtype=jnp.bfloat16,
                      vmem_budget_bytes=None):
    """Reproduces Attention.forward.  Returns (A, H).

    x : (B, N, ...) -- trailing dims are flattened into L.
    w1: (L, D), b1: (D,), w2: (D, K), b2: (K,)

    Note: H/W1 go through the MXU in `compute_dtype` (default bf16, f32
    accumulation), so A carries ~1e-2-level error vs an f32 reference; pass
    compute_dtype=jnp.float32 for exact-precision scores.
    """
    B, N = x.shape[0], x.shape[1]
    L = 1
    for s in x.shape[2:]:
        L *= int(s)
    H = x.reshape(B, N, L)                  # returned unchanged (ref semantics)

    D = int(w1.shape[1])
    K = int(w2.shape[1])
    M = B * N

    if vmem_budget_bytes is None:
        vmem_budget_bytes = _pick_vmem_budget()

    # Output width: keep exact for small K (no writeback inflation); only pad
    # to a lane multiple when K is already large and ragged.
    Kout = _round_up(K, 128) if (K >= 32 and K % 128 != 0) else K
    k_is_one = (K == 1)

    # ---- row-tile selection against the VMEM budget -------------------------
    lp = _round_up(L, 128)
    dp = _round_up(D, 128)
    kp_vmem = _round_up(Kout, 128)          # out tile is lane-padded in VMEM

    def vmem_estimate(t):
        est = 2 * t * lp * 4                # double-buffered f32 H tile
        est += t * lp * 2                   # in-kernel bf16 copy of H tile
        est += 2 * t * dp * 4               # z / tanh f32 temporaries
        est += 2 * t * kp_vmem * 4          # double-buffered output tile
        est += 2 * (lp * dp * 4 + dp * kp_vmem * 4 + dp * 4 + kp_vmem * 4)
        est += lp * dp * 2                  # in-kernel bf16 copy of W1
        return est

    if tm is None:
        tm = 1024                           # big tiles amortize grid-step cost
    tm_eff = _round_up(min(tm, _round_up(M, 8)), 8)
    while tm_eff > 8 and vmem_estimate(tm_eff) > vmem_budget_bytes:
        tm_eff = max(8, _round_up(tm_eff // 2, 8))
    # Keep both v7x TensorCores busy: prefer at least two parallel grid steps.
    while tm_eff > 8 and _cdiv(M, tm_eff) < 2 and M > 8:
        tm_eff = max(8, _round_up(tm_eff // 2, 8))
    n_tiles = _cdiv(M, tm_eff)              # last tile may be partial (masked)

    # ---- operand preparation (no cast / pad of the dominant H stream) -------
    H2 = H.reshape(M, L)
    b1_2 = b1.reshape(1, D).astype(jnp.float32)

    if k_is_one:
        w2_in = w2.reshape(1, D).astype(jnp.float32)   # row vector (VPU path)
        b2_in = b2.reshape(1, 1).astype(jnp.float32)
        w2_spec = pl.BlockSpec((1, D), lambda i: (0, 0))
        b2_spec = pl.BlockSpec((1, 1), lambda i: (0, 0))
    else:
        w2_in = w2.astype(jnp.float32)
        b2_in = b2.reshape(1, K).astype(jnp.float32)
        if Kout != K:
            w2_in = jnp.pad(w2_in, ((0, 0), (0, Kout - K)))
            b2_in = jnp.pad(b2_in, ((0, 0), (0, Kout - K)))
        w2_spec = pl.BlockSpec((D, Kout), lambda i: (0, 0))
        b2_spec = pl.BlockSpec((1, Kout), lambda i: (0, 0))

    in_itemsize = jnp.zeros((), H2.dtype).dtype.itemsize
    out_itemsize = jnp.zeros((), x.dtype).dtype.itemsize
    cost = pl.CostEstimate(
        flops=2 * M * L * D + 2 * M * D * K,
        transcendentals=M * D,
        bytes_accessed=(M * L * in_itemsize + M * Kout * out_itemsize
                        + L * D * in_itemsize + D * Kout * 4 + D * 4 + Kout * 4),
    )

    A2 = pl.pallas_call(
        _make_attention_kernel(k_is_one, compute_dtype),
        out_shape=jax.ShapeDtypeStruct((M, Kout), x.dtype),
        grid_spec=pltpu.PrefetchScalarGridSpec(
            num_scalar_prefetch=0,
            grid=(n_tiles,),
            in_specs=[
                pl.BlockSpec((tm_eff, L), lambda i: (i, 0)),   # H row tile
                pl.BlockSpec((L, D), lambda i: (0, 0)),        # W1 (resident)
                pl.BlockSpec((1, D), lambda i: (0, 0)),        # b1
                w2_spec,                                       # W2 (resident)
                b2_spec,                                       # b2
            ],
            out_specs=pl.BlockSpec((tm_eff, Kout), lambda i: (i, 0)),
        ),
        compiler_params=pltpu.CompilerParams(
            dimension_semantics=("parallel",),
            vmem_limit_bytes=int(vmem_budget_bytes)),
        cost_estimate=cost,
    )(H2, w1, b1_2, w2_in, b2_in)

    A = A2[:, :K] if Kout != K else A2
    return A.reshape(B, N, K), H


if __name__ == "__main__":
    # Small shapes consistent with the module:
    #   x: (B=2, N=8, 4, 8) -> H: (2, 8, 32)  so L = 32
    #   D = 64 hidden units, K = 1 attention head
    B, N, s1, s2 = 2, 8, 4, 8
    L, D, K = s1 * s2, 64, 1

    key = jax.random.PRNGKey(0)
    kx, kw1, kb1, kw2, kb2 = jax.random.split(key, 5)

    x = jax.random.normal(kx, (B, N, s1, s2), dtype=jnp.float32)

    # Deterministic parameter init (uniform, torch.nn.Linear-style bounds).
    bound1 = 1.0 / (L ** 0.5)
    bound2 = 1.0 / (D ** 0.5)
    w1 = jax.random.uniform(kw1, (L, D), jnp.float32, -bound1, bound1)
    b1 = jax.random.uniform(kb1, (D,), jnp.float32, -bound1, bound1)
    w2 = jax.random.uniform(kw2, (D, K), jnp.float32, -bound2, bound2)
    b2 = jax.random.uniform(kb2, (K,), jnp.float32, -bound2, bound2)

    A, H = attention_forward(x, w1, b1, w2, b2)
    jax.block_until_ready(A)
    jax.block_until_ready(H)

    # Reference check in plain JAX (f32). Kernel runs the first matmul in bf16
    # with f32 accumulation, so allow a bf16-level tolerance on A.
    H_ref = x.reshape(B, N, L)
    A_ref = jnp.tanh(H_ref @ w1 + b1) @ w2 + b2
    assert A.shape == (B, N, K)
    assert H.shape == (B, N, L)
    assert jnp.array_equal(H, H_ref)
    assert jnp.allclose(A, A_ref, atol=2e-2, rtol=2e-2)

    # Also exercise the K > 1 MXU path (small K, unpadded output block).
    K2 = 3
    w2b = jax.random.uniform(kw2, (D, K2), jnp.float32, -bound2, bound2)
    b2b = jax.random.uniform(kb2, (K2,), jnp.float32, -bound2, bound2)
    A_k2, _ = attention_forward(x, w1, b1, w2b, b2b)
    jax.block_until_ready(A_k2)
    A_k2_ref = jnp.tanh(H_ref @ w1 + b1) @ w2b + b2b
    assert A_k2.shape == (B, N, K2)
    assert jnp.allclose(A_k2, A_k2_ref, atol=2e-2, rtol=2e-2)

    print("KERNEL_OK")
</pallas_src>

<mosaic_0001>
module attributes {stable_mosaic.version = 11 : i64} {
  func.func @kernel(%arg0: i32, %arg1: memref<8x32xf32, #tpu.memory_space<vmem>>, %arg2: memref<32x64xf32, #tpu.memory_space<vmem>>, %arg3: memref<1x64xf32, #tpu.memory_space<vmem>>, %arg4: memref<1x64xf32, #tpu.memory_space<vmem>>, %arg5: memref<1x1xf32, #tpu.memory_space<vmem>>, %arg6: memref<8x1xf32, #tpu.memory_space<vmem>>) attributes {dimension_semantics = [#tpu.dimension_semantics<parallel>], iteration_bounds = array<i64: 2>, scalar_prefetch = 0 : i64, scratch_operands = 0 : i64, tpu.core_type = #tpu.core_type<tc>, window_params = [{transform_indices = @transform_0, window_bounds = array<i64: 8, 32>}, {pipeline_mode = #tpu.pipeline_mode<synchronous>, transform_indices = @transform_1, window_bounds = array<i64: 32, 64>}, {pipeline_mode = #tpu.pipeline_mode<synchronous>, transform_indices = @transform_2, window_bounds = array<i64: 1, 64>}, {pipeline_mode = #tpu.pipeline_mode<synchronous>, transform_indices = @transform_3, window_bounds = array<i64: 1, 64>}, {pipeline_mode = #tpu.pipeline_mode<synchronous>, transform_indices = @transform_4, window_bounds = array<i64: 1, 1>}, {transform_indices = @transform_5, window_bounds = array<i64: 8, 1>}]} {
    %c0 = arith.constant 0 : index
    %c0_0 = arith.constant 0 : index
    %0 = vector.load %arg1[%c0, %c0_0] : memref<8x32xf32, #tpu.memory_space<vmem>>, vector<8x32xf32>
    %1 = arith.truncf %0 : vector<8x32xf32> to vector<8x32xbf16>
    %c0_1 = arith.constant 0 : index
    %c0_2 = arith.constant 0 : index
    %2 = vector.load %arg2[%c0_1, %c0_2] : memref<32x64xf32, #tpu.memory_space<vmem>>, vector<32x64xf32>
    %3 = arith.truncf %2 : vector<32x64xf32> to vector<32x64xbf16>
    %cst = arith.constant dense<0.000000e+00> : vector<8x64xf32>
    %4 = tpu.matmul %1, %3, %cst {dimension_numbers = #tpu.dot_dimension_numbers<[1], [0], [0], [1], [0, 0, 1, 1], [], []>} : vector<8x32xbf16>, vector<32x64xbf16>, vector<8x64xf32> -> vector<8x64xf32>
    %c0_3 = arith.constant 0 : index
    %c0_4 = arith.constant 0 : index
    %5 = vector.load %arg3[%c0_3, %c0_4] : memref<1x64xf32, #tpu.memory_space<vmem>>, vector<1x64xf32>
    %6 = vector.broadcast %5 : vector<1x64xf32> to vector<8x64xf32>
    %7 = arith.addf %4, %6 : vector<8x64xf32>
    %8 = math.tanh %7 : vector<8x64xf32>
    %c0_5 = arith.constant 0 : index
    %c0_6 = arith.constant 0 : index
    %9 = vector.load %arg4[%c0_5, %c0_6] : memref<1x64xf32, #tpu.memory_space<vmem>>, vector<1x64xf32>
    %10 = vector.broadcast %9 : vector<1x64xf32> to vector<8x64xf32>
    %11 = arith.mulf %8, %10 : vector<8x64xf32>
    %cst_7 = arith.constant dense<0.000000e+00> : vector<8xf32>
    %12 = vector.multi_reduction <add>, %11, %cst_7 [1] : vector<8x64xf32> to vector<8xf32>
    %13 = vector.shape_cast %12 : vector<8xf32> to vector<8x1xf32>
    %c0_8 = arith.constant 0 : index
    %c0_9 = arith.constant 0 : index
    %14 = vector.load %arg5[%c0_8, %c0_9] : memref<1x1xf32, #tpu.memory_space<vmem>>, vector<1x1xf32>
    %15 = vector.broadcast %14 : vector<1x1xf32> to vector<8x1xf32>
    %16 = arith.addf %13, %15 : vector<8x1xf32>
    %c0_10 = arith.constant 0 : index
    %c0_11 = arith.constant 0 : index
    %17 = vector.load %arg6[%c0_10, %c0_11] : memref<8x1xf32, #tpu.memory_space<vmem>>, vector<8x1xf32>
    tpu.vector_store %arg6[%c0_10, %c0_11], %16 {strides = array<i32>} : memref<8x1xf32, #tpu.memory_space<vmem>>, vector<8x1xf32>,
    return
  }
  func.func @transform_0(%arg0: i32) -> (i32, i32) {
    %c0_i32 = arith.constant 0 : i32
    %c0_i32_0 = arith.constant 0 : i32
    return %arg0, %c0_i32 : i32, i32
  }
  func.func @transform_1(%arg0: i32) -> (i32, i32) {
    %c0_i32 = arith.constant 0 : i32
    %c0_i32_0 = arith.constant 0 : i32
    %c0_i32_1 = arith.constant 0 : i32
    return %c0_i32, %c0_i32_0 : i32, i32
  }
  func.func @transform_2(%arg0: i32) -> (i32, i32) {
    %c0_i32 = arith.constant 0 : i32
    %c0_i32_0 = arith.constant 0 : i32
    %c0_i32_1 = arith.constant 0 : i32
    return %c0_i32, %c0_i32_0 : i32, i32
  }
  func.func @transform_3(%arg0: i32) -> (i32, i32) {
    %c0_i32 = arith.constant 0 : i32
    %c0_i32_0 = arith.constant 0 : i32
    %c0_i32_1 = arith.constant 0 : i32
    return %c0_i32, %c0_i32_0 : i32, i32
  }
  func.func @transform_4(%arg0: i32) -> (i32, i32) {
    %c0_i32 = arith.constant 0 : i32
    %c0_i32_0 = arith.constant 0 : i32
    %c0_i32_1 = arith.constant 0 : i32
    return %c0_i32, %c0_i32_0 : i32, i32
  }
  func.func @transform_5(%arg0: i32) -> (i32, i32) {
    %c0_i32 = arith.constant 0 : i32
    %c0_i32_0 = arith.constant 0 : i32
    return %arg0, %c0_i32 : i32, i32
  }
}

</mosaic_0001>

<llo_original>
// kernel: tpu_custom_call.1
$region0: #{tpu_custom_call.1}
  #allocation0 [shape = 'u32[]', space=smem, size = 0x4, offset = 0x4, fixed_abs, tag = 'smem constant byte address 0x4 - core index']
  #allocation1 [shape = 'u32[144,128]{1,0:T(1,128)}', space=vmem, size = 0x12000, scoped, tag = 'internal scratch']
  #allocation2 [shape = 'f32[1,1]{1,0:T(1,128)S(1)}', space=vmem, size = 0x200, scoped, tag = 'scoped memory for tpu_custom_call.1']
  %s0 = inlined_call_operand.hbm [shape: f32[16,32], index: 0, kind: input, shape index: {}]
  %s1 = inlined_call_operand.hbm [shape: f32[32,64], index: 1, kind: input, shape index: {}]
  %s2 = inlined_call_operand.vmem [shape: f32[1,64], index: 2, kind: input, shape index: {}]
  %s3 = inlined_call_operand.vmem [shape: f32[1,64], index: 3, kind: input, shape index: {}]
  %s4 = inlined_call_operand.<no memory space> [shape: f32[1,1], index: 4, kind: input, shape index: {}]
  %s5 = inlined_call_operand.vmem [shape: f32[16,1], index: 5, kind: output, shape index: {}]
  %s6 = sld [smem:[#allocation0]]
  $region61: #{tpu_custom_call.1} parent=0
    _
  %s8 = ssub.s32 1, %s6
  %s9 = scalar_select 0, %s8, %s6
  %v10 = vstv %s4
  %11 = vst [vmem:[#allocation2] sm:$0x1] %v10
  $region1: #{tpu_custom_call.1} parent=0
    #allocation3 [shape = 'u8[8192]{0}', space=vmem, size = 0x2000, scoped, tag = 'input window, operand 0']
    #allocation4 [shape = 's32[2]{0}', space=sflag, size = 0x8, scoped, tag = 'scoped memory for tpu_custom_call.1']
    #allocation5 [shape = 'u8[16384]{0}', space=vmem, size = 0x4000, scoped, tag = 'input window, operand 1, single buffered']
    #allocation6 [shape = 's32[1]{0}', space=sflag, size = 0x4, scoped, tag = 'scoped memory for tpu_custom_call.1']
    %12 = vsyncpa [#allocation4], 0
    %s13 = scalar_lea.sflag [#allocation4], 1
    %14 = vsyncpa %s13, 0
    %15 = vsyncpa [#allocation6], 0
    loop: start=0, step=1, limit=4
    $region2: #{tpu_custom_call.1} parent=1 // loop_pre_header
      _
    $region3: #{tpu_custom_call.1} parent=1 // loop_header
      %s17 = sphi 0, %s21
      %p18 = scmp.ge.s32.totalorder %s17, 4
      %s27 = sphi 0, %s29
      %s30 = sphi 0, %s27
      %s31 = sphi 0, %s30
      %s47 = sphi 0, %s31
      %s51 = sphi 0, %s51
      %s53 = sphi 0, %s51
      %s54 = sphi 0, %s53
      %s68 = sphi 0, %s54
      %s72 = sphi 0, %s72
      %s74 = sphi 0, %s72
      %s75 = sphi 0, %s74
      %s89 = sphi 0, %s75
      %s93 = sphi 0, %s93
      %s95 = sphi 0, %s93
      %s96 = sphi 0, %s95
      %s110 = sphi 0, %s96
      %s114 = sphi 0, %s114
      %s116 = sphi 0, %s114
      %s117 = sphi 0, %s116
      %s131 = sphi 0, %s117
      %s137 = sphi 0, %s139
      %s140 = sphi 0, %s137
      %s141 = sphi 0, %s140
      %s157 = sphi 0, %s141
    $region4: #{tpu_custom_call.1} parent=1 // loop_header_branch
      %20 = sbr.rel (%p18) target = $region8
    $region5: #{tpu_custom_call.1} parent=1 // loop_body
      %s22 = ssub.s32 %s17, 1
      %s23 = ssub.s32 %s17, 2
      %s24 = sadd.s32 %s17, 1
      %s25 = ssub.s32 %s17, %s24
      %p26 = scmp.eq.s32.totalorder %s25, 0
      %s28 = sadd.s32 %s27, 1
      %s29 = scalar_select %p26, %s27, %s28
      %p32 = pneg %p26
      %p33 = scmp.eq.s32.totalorder %s17, 1
      %p34 = por %p32, %p33
      %p35 = scmp.ne.s32.totalorder %s27, %s30
      %p36 = scmp.eq.s32.totalorder %s17, 0
      %p37 = por %p35, %p36
      %p38 = scmp.ne.s32.totalorder %s27, %s30
      %p39 = scmp.eq.s32.totalorder %s22, 1
      %p40 = por %p38, %p39
      %p41 = scmp.ne.s32.totalorder %s30, %s31
      %p42 = scmp.eq.s32.totalorder %s22, 0
      %p43 = por %p41, %p42
      %p44 = scmp.ne.s32.totalorder %s30, %s31
      %p45 = scmp.eq.s32.totalorder %s23, 1
      %p46 = por %p44, %p45
      %p48 = scmp.ne.s32.totalorder %s31, %s47
      %p49 = scmp.eq.s32.totalorder %s23, 0
      %p50 = por %p48, %p49
      %s52 = sadd.s32 %s51, 1
      %p55 = scmp.eq.s32.totalorder %s17, 1
      %p56 = scmp.ne.s32.totalorder %s51, %s53
      %p57 = scmp.eq.s32.totalorder %s17, 0
      %p58 = por %p56, %p57
      %p59 = scmp.ne.s32.totalorder %s51, %s53
      %p60 = scmp.eq.s32.totalorder %s22, 1
      %p61 = por %p59, %p60
      %p62 = scmp.ne.s32.totalorder %s53, %s54
      %p63 = scmp.eq.s32.totalorder %s22, 0
      %p64 = por %p62, %p63
      %p65 = scmp.ne.s32.totalorder %s53, %s54
      %p66 = scmp.eq.s32.totalorder %s23, 1
      %p67 = por %p65, %p66
      %p69 = scmp.ne.s32.totalorder %s54, %s68
      %p70 = scmp.eq.s32.totalorder %s23, 0
      %p71 = por %p69, %p70
      %s73 = sadd.s32 %s72, 1
      %p76 = scmp.eq.s32.totalorder %s17, 1
      %p77 = scmp.ne.s32.totalorder %s72, %s74
      %p78 = scmp.eq.s32.totalorder %s17, 0
      %p79 = por %p77, %p78
      %p80 = scmp.ne.s32.totalorder %s72, %s74
      %p81 = scmp.eq.s32.totalorder %s22, 1
      %p82 = por %p80, %p81
      %p83 = scmp.ne.s32.totalorder %s74, %s75
      %p84 = scmp.eq.s32.totalorder %s22, 0
      %p85 = por %p83, %p84
      %p86 = scmp.ne.s32.totalorder %s74, %s75
      %p87 = scmp.eq.s32.totalorder %s23, 1
      %p88 = por %p86, %p87
      %p90 = scmp.ne.s32.totalorder %s75, %s89
      %p91 = scmp.eq.s32.totalorder %s23, 0
      %p92 = por %p90, %p91
      %s94 = sadd.s32 %s93, 1
      %p97 = scmp.eq.s32.totalorder %s17, 1
      %p98 = scmp.ne.s32.totalorder %s93, %s95
      %p99 = scmp.eq.s32.totalorder %s17, 0
      %p100 = por %p98, %p99
      %p101 = scmp.ne.s32.totalorder %s93, %s95
      %p102 = scmp.eq.s32.totalorder %s22, 1
      %p103 = por %p101, %p102
      %p104 = scmp.ne.s32.totalorder %s95, %s96
      %p105 = scmp.eq.s32.totalorder %s22, 0
      %p106 = por %p104, %p105
      %p107 = scmp.ne.s32.totalorder %s95, %s96
      %p108 = scmp.eq.s32.totalorder %s23, 1
      %p109 = por %p107, %p108
      %p111 = scmp.ne.s32.totalorder %s96, %s110
      %p112 = scmp.eq.s32.totalorder %s23, 0
      %p113 = por %p111, %p112
      %s115 = sadd.s32 %s114, 1
      %p118 = scmp.eq.s32.totalorder %s17, 1
      %p119 = scmp.ne.s32.totalorder %s114, %s116
      %p120 = scmp.eq.s32.totalorder %s17, 0
      %p121 = por %p119, %p120
      %p122 = scmp.ne.s32.totalorder %s114, %s116
      %p123 = scmp.eq.s32.totalorder %s22, 1
      %p124 = por %p122, %p123
      %p125 = scmp.ne.s32.totalorder %s116, %s117
      %p126 = scmp.eq.s32.totalorder %s22, 0
      %p127 = por %p125, %p126
      %p128 = scmp.ne.s32.totalorder %s116, %s117
      %p129 = scmp.eq.s32.totalorder %s23, 1
      %p130 = por %p128, %p129
      %p132 = scmp.ne.s32.totalorder %s117, %s131
      %p133 = scmp.eq.s32.totalorder %s23, 0
      %p134 = por %p132, %p133
      %s135 = ssub.s32 %s17, %s24
      %p136 = scmp.eq.s32.totalorder %s135, 0
      %s138 = sadd.s32 %s137, 1
      %s139 = scalar_select %p136, %s137, %s138
      %p142 = pneg %p136
      %p143 = scmp.eq.s32.totalorder %s17, 1
      %p144 = por %p142, %p143
      %p145 = scmp.ne.s32.totalorder %s137, %s140
      %p146 = scmp.eq.s32.totalorder %s17, 0
      %p147 = por %p145, %p146
      %p148 = scmp.ne.s32.totalorder %s137, %s140
      %p149 = scmp.eq.s32.totalorder %s22, 1
      %p150 = por %p148, %p149
      %p151 = scmp.ne.s32.totalorder %s140, %s141
      %p152 = scmp.eq.s32.totalorder %s22, 0
      %p153 = por %p151, %p152
      %p154 = scmp.ne.s32.totalorder %s140, %s141
      %p155 = scmp.eq.s32.totalorder %s23, 1
      %p156 = por %p154, %p155
      %p158 = scmp.ne.s32.totalorder %s141, %s157
      %p159 = scmp.eq.s32.totalorder %s23, 0
      %p160 = por %p158, %p159
      %p161 = scmp.le.s32.totalorder 1, %s17
      %p162 = scmp.lt.s32.totalorder %s17, 3
      %p163 = pnand %p161, %p162
      %p164 = pneg %p163
      // Predicated region
      $region9: #{tpu_custom_call.1} parent=5 // pred_check
        _
      $region10: #{tpu_custom_call.1} parent=5 // pred_check_branch
        %166 = sbr.rel (%p163) target = $region12
      $region11: #{tpu_custom_call.1} parent=5 // pred_region
        %s167 = ssub.s32 %s17, 1
        // Predicated region
        $region13: #{tpu_custom_call.1} parent=11 // pred_check
          %p168 = pneg %p64
        $region14: #{tpu_custom_call.1} parent=11 // pred_check_branch
          %170 = sbr.rel (%p168) target = $region16
        $region15: #{tpu_custom_call.1} parent=11 // pred_region
          %s172 = ssub.s32 512, 512
          %173 = vsyncadd [#allocation6], %s172
          %s174 = sshll.u32 [#allocation5], 4
          %s175 = int_to_ptr.vmem [resolvable:$true] %s174
          %180 = dma.hbm_to_vmem [thread:$0]  %s1, 512, %s175, [#allocation6], 128, 128, 8
        $region16: #{tpu_custom_call.1} parent=11 // pred_fallthru
          _
        // Predicated region
        $region17: #{tpu_custom_call.1} parent=11 // pred_check
          %p181 = pneg %p85
        $region18: #{tpu_custom_call.1} parent=11 // pred_check_branch
          %183 = sbr.rel (%p181) target = $region20
        $region19: #{tpu_custom_call.1} parent=11 // pred_region
          _
        $region20: #{tpu_custom_call.1} parent=11 // pred_fallthru
          _
        // Predicated region
        $region21: #{tpu_custom_call.1} parent=11 // pred_check
          %p184 = pneg %p106
        $region22: #{tpu_custom_call.1} parent=11 // pred_check_branch
          %186 = sbr.rel (%p184) target = $region24
        $region23: #{tpu_custom_call.1} parent=11 // pred_region
          _
        $region24: #{tpu_custom_call.1} parent=11 // pred_fallthru
          _
        // Predicated region
        $region25: #{tpu_custom_call.1} parent=11 // pred_check
          %p187 = pneg %p127
        $region26: #{tpu_custom_call.1} parent=11 // pred_check_branch
          %189 = sbr.rel (%p187) target = $region28
        $region27: #{tpu_custom_call.1} parent=11 // pred_region
          _
        $region28: #{tpu_custom_call.1} parent=11 // pred_fallthru
          _
      $region12: #{tpu_custom_call.1} parent=5 // pred_fallthru
        _
      %p190 = scmp.lt.s32.totalorder %s17, 2
      // Predicated region
      $region29: #{tpu_custom_call.1} parent=5 // pred_check
        %p191 = pneg %p190
      $region30: #{tpu_custom_call.1} parent=5 // pred_check_branch
        %193 = sbr.rel (%p191) target = $region32
      $region31: #{tpu_custom_call.1} parent=5 // pred_region
        // Predicated region
        $region33: #{tpu_custom_call.1} parent=31 // pred_check
          %p194 = pneg %p37
        $region34: #{tpu_custom_call.1} parent=31 // pred_check_branch
          %196 = sbr.rel (%p194) target = $region36
        $region35: #{tpu_custom_call.1} parent=31 // pred_region
          %s197 = sand.u32 %s27, 1
          %s198 = scalar_lea.sflag [#allocation4], %s197
          %s199 = sand.u32 %s27, 1
          %s200 = smul.addr %s199, 8
          %s201 = scalar_lea.vmem [#allocation3], %s200
          %s203 = ssub.s32 128, 128
          %204 = vsyncadd %s198, %s203
          %s205 = smul.addr %s17, 128
          %s206 = scalar_lea.hbm %s0, %s205
          %s208 = sshll.u32 %s201, 4
          %s209 = int_to_ptr.vmem [resolvable:$true] %s208
          %211 = dma.hbm_to_vmem [thread:$0]  %s206, 128, %s209, %s198
        $region36: #{tpu_custom_call.1} parent=31 // pred_fallthru
          _
      $region32: #{tpu_custom_call.1} parent=5 // pred_fallthru
        _
      %p212 = scmp.le.s32.totalorder 1, %s17
      %p213 = scmp.lt.s32.totalorder %s17, 3
      %p214 = pnand %p212, %p213
      %p215 = pneg %p214
      // Predicated region
      $region37: #{tpu_custom_call.1} parent=5 // pred_check
        _
      $region38: #{tpu_custom_call.1} parent=5 // pred_check_branch
        %217 = sbr.rel (%p214) target = $region40
      $region39: #{tpu_custom_call.1} parent=5 // pred_region
        %s218 = ssub.s32 %s17, 1
        %s219 = sand.u32 %s30, 1
        %s220 = scalar_lea.sflag [#allocation4], %s219
        %s221 = sand.u32 %s30, 1
        %s222 = smul.addr %s221, 8
        %s223 = scalar_lea.vmem [#allocation3], %s222
        // Predicated region
        $region41: #{tpu_custom_call.1} parent=39 // pred_check
          %p224 = pneg %p43
        $region42: #{tpu_custom_call.1} parent=39 // pred_check_branch
          %226 = sbr.rel (%p224) target = $region44
        $region43: #{tpu_custom_call.1} parent=39 // pred_region
          %227 = dma.done %s220, 128
        $region44: #{tpu_custom_call.1} parent=39 // pred_fallthru
          _
        // Predicated region
        $region45: #{tpu_custom_call.1} parent=39 // pred_check
          %p228 = pneg %p64
        $region46: #{tpu_custom_call.1} parent=39 // pred_check_branch
          %230 = sbr.rel (%p228) target = $region48
        $region47: #{tpu_custom_call.1} parent=39 // pred_region
          %231 = dma.done [#allocation6], 512
        $region48: #{tpu_custom_call.1} parent=39 // pred_fallthru
          _
        %s232 = sand.u32 %s30, 1
        %s233 = scalar_lea.sflag [#allocation4], %s232
        %s234 = sand.u32 %s30, 1
        %s235 = smul.addr %s234, 8
        %s236 = scalar_lea.vmem [#allocation3], %s235
        %p237 = pneg %p43
        %p238 = pneg %p40
        %p239 = pneg %p64
        %p240 = pneg %p61
        %p241 = pneg %p85
        %p242 = pneg %p82
        %p243 = pneg %p106
        %p244 = pneg %p103
        %p245 = pneg %p127
        %p246 = pneg %p124
        %p247 = pneg %p153
        %p248 = pneg %p150
        %p249 = scmp.lt.s32.totalorder %s22, 1
        %s250 = scalar_select %p249, %s22, 1
        %s251 = smul.addr %s250, 8
        %s252 = scalar_lea.vmem %s5, %s251
        %p253 = scmp.lt.s32.totalorder %s22, 1
        %s254 = scalar_select %p253, %s22, 1
        %s255 = smul.addr %s254, 8
        %s256 = scalar_lea.vmem %s5, %s255
        %v258 = vld [vmem:[%s223] sm:$0xff]
        %v259 = vpack.c.bf16 %v258, %v258
        %v260 = vld [vmem:[#allocation5] sm:$0xff]
        %v261 = vld [vmem:[#allocation5 + $0x8] sm:$0xff]
        %v262 = vld [vmem:[#allocation5 + $0x10] sm:$0xff]
        %v263 = vld [vmem:[#allocation5 + $0x18] sm:$0xff]
        %v264 = vpack.c.bf16 %v261, %v260
        %v265 = vpack.c.bf16 %v263, %v262
        %v266 = vld [vmem:[%s2] sm:$0x1]
        %v268 = vlaneseq
        %v269 = vshrl.u32 %v268, 7
        %v270 = vsub.s32 0, %v269
        %v271 = vrot.slane %v266, %v270
        %vm273 = vcmask 261120
        %v275 = vsel %vm273, %v259, 0
        %277 = vmatprep.subr.bf16.mxu0 0
        %278 = vmatpush1.bf16.msra.mxu0 0
        %279 = vmatprep.subr.bf16.mxu0 0
        %280 = vmatpush1.bf16.msra.mxu0 0
        %281 = vmatprep.subr.bf16.mxu0 0
        %282 = vmatpush1.bf16.msra.mxu0 0
        %283 = vmatprep.subr.bf16.mxu0 0
        %284 = vmatpush1.bf16.msra.mxu0 0
        %285 = vmatprep.subr.bf16.mxu0 0
        %286 = vmatpush1.bf16.msra.mxu0 0
        %287 = vmatprep.subr.bf16.mxu0 0
        %288 = vmatpush1.bf16.msra.mxu0 0
        %289 = vmatprep.subr.bf16.mxu0 0
        %290 = vmatpush1.bf16.msra.mxu0 %v265
        %291 = vmatprep.subr.bf16.mxu0 0
        %292 = vmatpush1.bf16.msra.mxu0 %v264
        %293 = vmatprep.subr.bf16.mxu0 0
        %294 = vmatpush2.bf16.msra.mxu0 0
        %295 = vmatprep.subr.bf16.mxu0 0
        %296 = vmatpush2.bf16.msra.mxu0 0
        %297 = vmatprep.subr.bf16.mxu0 0
        %298 = vmatpush2.bf16.msra.mxu0 0
        %299 = vmatprep.subr.bf16.mxu0 0
        %300 = vmatpush2.bf16.msra.mxu0 0
        %301 = vmatprep.subr.bf16.mxu0 0
        %302 = vmatpush2.bf16.msra.mxu0 0
        %303 = vmatprep.subr.bf16.mxu0 0
        %304 = vmatpush2.bf16.msra.mxu0 0
        %305 = vmatprep.subr.bf16.mxu0 0
        %306 = vmatpush2.bf16.msra.mxu0 0
        %307 = vmatprep.subr.bf16.mxu0 0
        %308 = vmatpush2.bf16.msra.mxu0 0
        %309 = vmatprep.mubr.bf16.mxu0 0
        %310 = vmatmul.mubr.bf16.gmra.mxu0 %v275
        %v311 = vpop.f32.mrf.mxu0
        %v312 = vadd.f32 %v271, %v311
        %v313 = vpop.f32.mrf.mxu0
        %v314 = vpop.f32.mrf.mxu0
        %v315 = vpop.f32.mrf.mxu0
        %316 = vdwg.mxu0
        %v317 = vtanh.pop %v312
        %v318 = vld [vmem:[%s3] sm:$0x1]
        %v320 = vlaneseq
        %v321 = vshrl.u32 %v320, 7
        %v322 = vsub.s32 0, %v321
        %v323 = vrot.slane %v318, %v322
        %v325 = vmul.f32 %v317, %v323
        %vm326 = vcmask 523264
        %v327 = vsel %vm326, %v325, 0.0
        %328 = vadd.xlane.f32.xlu0 %v327
        %v329 = vpop.xlane.xlu0 %328
        %v330 = vld [vmem:[#allocation2] sm:$0x1]
        %v332 = vlaneseq
        %v333 = vshrl.u32 %v332, 7
        %v334 = vsub.s32 0, %v333
        %v335 = vrot.slane %v330, %v334
        %v337 = vadd.f32 %v329, %v335
        %vm338 = vcmask 7168
        %339 = vst.msk [vmem:[%s256] sm:$0xff] %vm338, %v337
        %p340 = scmp.lt.s32.totalorder %s22, 1
        %s341 = scalar_select %p340, %s22, 1
        %s342 = smul.addr %s341, 8
        %s343 = scalar_lea.vmem %s5, %s342
        // Predicated region
        $region49: #{tpu_custom_call.1} parent=39 // pred_check
          %p344 = pneg %p150
        $region50: #{tpu_custom_call.1} parent=39 // pred_check_branch
          %346 = sbr.rel (%p344) target = $region52
        $region51: #{tpu_custom_call.1} parent=39 // pred_region
          _
        $region52: #{tpu_custom_call.1} parent=39 // pred_fallthru
          _
      $region40: #{tpu_custom_call.1} parent=5 // pred_fallthru
        _
      %p347 = scmp.le.s32.totalorder 2, %s17
      // Predicated region
      $region53: #{tpu_custom_call.1} parent=5 // pred_check
        %p348 = pneg %p347
      $region54: #{tpu_custom_call.1} parent=5 // pred_check_branch
        %350 = sbr.rel (%p348) target = $region56
      $region55: #{tpu_custom_call.1} parent=5 // pred_region
        %s351 = ssub.s32 %s17, 2
        // Predicated region
        $region57: #{tpu_custom_call.1} parent=55 // pred_check
          %p352 = pneg %p156
        $region58: #{tpu_custom_call.1} parent=55 // pred_check_branch
          %354 = sbr.rel (%p352) target = $region60
        $region59: #{tpu_custom_call.1} parent=55 // pred_region
          %p355 = scmp.lt.s32.totalorder %s23, 1
          %s356 = scalar_select %p355, %s23, 1
          %s357 = smul.addr %s356, 8
          %s358 = scalar_lea.vmem %s5, %s357
        $region60: #{tpu_custom_call.1} parent=55 // pred_fallthru
          _
      $region56: #{tpu_custom_call.1} parent=5 // pred_fallthru
        _
    $region6: #{tpu_custom_call.1} parent=1 // loop_footer
      %s21 = sadd.s32 1, %s17
    $region7: #{tpu_custom_call.1} parent=1 // loop_footer_branch
      %16 = sbr.rel target = $region3
    $region8: #{tpu_custom_call.1} parent=1 // loop_exit
      _
    %359 = vsyncpa [#allocation4], 1
    %s360 = scalar_lea.sflag [#allocation4], 1
    %361 = vsyncpa %s360, 1
    %362 = vsyncpa [#allocation6], 1

</llo_original>
